<compile_context>
chip_gen: v7x
topology: tpu7x:2x2x1
jax: 0.10.0
libtpu: 0.0.40
codegen_flags: <defaults>
</compile_context>

<pallas_src>
import functools

import jax
import jax.numpy as jnp
from jax.experimental import pallas as pl
from jax.experimental.pallas import tpu as pltpu


def actor_kernel(x_ref, w1_ref, b1_ref, w2_ref, b2_ref, out_ref):
    # x tile: (obs_dim, TB) f32, feature-major (batch on the 128-lane axis).
    x = x_ref[...].astype(jnp.bfloat16)            # bf16 MXU operand

    # ---- Linear 1 + Tanh: (hidden, obs_dim) @ (obs_dim, TB) -> (hidden, TB) ----
    h = jnp.dot(w1_ref[...], x, preferred_element_type=jnp.float32)
    h = jnp.tanh(h + b1_ref[...])                  # elementwise kept in f32 (v5e-safe)

    # ---- Linear 2: (n_actions, hidden) @ (hidden, TB) -> (n_actions, TB) ----
    logits = jnp.dot(w2_ref[...], h.astype(jnp.bfloat16),
                     preferred_element_type=jnp.float32)
    logits = logits + b2_ref[...]

    # ---- stable log_softmax over the action axis (axis 0 => per-column/lane) ----
    m = jnp.max(logits, axis=0, keepdims=True)
    shifted = logits - m
    lse = jnp.log(jnp.sum(jnp.exp(shifted), axis=0, keepdims=True))
    out_ref[...] = shifted - lse


def _round_up(n, m):
    return ((n + m - 1) // m) * m


@functools.partial(jax.jit, static_argnames=("block_b",))
def actor_forward(x, w1, b1, w2, b2, *, block_b=512):
    """ActorModel.forward: log_softmax(W2 @ tanh(W1 @ x + b1) + b2).

    x  : (B, obs_dim) or (obs_dim,) float32 observations (mirrors to_tensor).
    w1 : (hidden, obs_dim)   -- native PyTorch (out_features, in_features) layout
    b1 : (hidden,) / (hidden, 1)
    w2 : (n_actions, hidden)
    b2 : (n_actions,) / (n_actions, 1)
    Returns (B, n_actions) float32 log-probabilities (the Categorical logits).
    """
    if x.ndim == 1:                                    # to_tensor's unsqueeze(0)
        x = x[None, :]
    x = x.astype(jnp.float32)
    B, obs_dim = x.shape
    hidden = w1.shape[0]
    n_actions = w2.shape[0]

    # Batch tile: multiple of 256 (MXU width on v6e/v7x, 2x128 on v5e), capped at
    # block_b; pad the batch up to a whole number of tiles (zero columns are
    # harmless: log_softmax is per-column, padded columns are sliced away).
    tb = min(block_b, _round_up(B, 256))
    bp = _round_up(B, tb)

    # Feature-major layout so the batch rides the 128-lane axis.
    xt = jnp.pad(x.T, ((0, 0), (0, bp - B)))           # (obs_dim, Bp)

    # bf16 MXU operands; biases stay f32 (added to f32 accumulators). In a real
    # training loop the weights would be stored in bf16 once, outside the hot path.
    w1 = w1.astype(jnp.bfloat16)
    w2 = w2.astype(jnp.bfloat16)
    b1 = jnp.asarray(b1, jnp.float32).reshape(hidden, 1)
    b2 = jnp.asarray(b2, jnp.float32).reshape(n_actions, 1)

    grid = (pl.cdiv(bp, tb),)
    cost = pl.CostEstimate(
        flops=2 * bp * (obs_dim * hidden + hidden * n_actions),
        transcendentals=bp * (hidden + n_actions),
        bytes_accessed=4 * bp * (obs_dim + n_actions)
        + 2 * (hidden * obs_dim + n_actions * hidden)
        + 4 * (hidden + n_actions),
    )

    out_t = pl.pallas_call(
        actor_kernel,
        out_shape=jax.ShapeDtypeStruct((n_actions, bp), jnp.float32),
        grid=grid,
        in_specs=[
            pl.BlockSpec((obs_dim, tb), lambda i: (0, i)),         # x tile (streamed)
            pl.BlockSpec((hidden, obs_dim), lambda i: (0, 0)),     # W1 (VMEM-resident)
            pl.BlockSpec((hidden, 1), lambda i: (0, 0)),           # b1
            pl.BlockSpec((n_actions, hidden), lambda i: (0, 0)),   # W2
            pl.BlockSpec((n_actions, 1), lambda i: (0, 0)),        # b2
        ],
        out_specs=pl.BlockSpec((n_actions, tb), lambda i: (0, i)), # lane-dense output
        compiler_params=pltpu.CompilerParams(
            dimension_semantics=("parallel",),   # v7x: shard batch grid over 2 TCs
        ),
        cost_estimate=cost,
    )(xt, w1, b1, w2, b2)

    return out_t[:, :B].T                               # (B, n_actions)


def orthogonal(key, shape, gain):
    """Deterministic orthogonal init (matches torch.nn.init.orthogonal_ semantics)."""
    rows, cols = shape
    n = max(rows, cols)
    a = jax.random.normal(key, (n, n), dtype=jnp.float32)
    q, r = jnp.linalg.qr(a)
    q = q * jnp.sign(jnp.diag(r))                       # make Q uniform
    return gain * q[:rows, :cols]


if __name__ == "__main__":
    obs_dim, hidden, n_actions = 8, 64, 4
    batch = 2

    key = jax.random.PRNGKey(0)
    kx, k1, k2, kb = jax.random.split(key, 4)

    gain = 5.0 / 3.0  # nn.init.calculate_gain('tanh')
    # Native PyTorch Linear layout: weight is (out_features, in_features).
    w1 = orthogonal(k1, (hidden, obs_dim), gain)        # (64, 8)
    b1 = jnp.full((hidden, 1), 1e-6, dtype=jnp.float32)
    w2 = orthogonal(k2, (n_actions, hidden), gain)      # (4, 64)
    b2 = jnp.full((n_actions, 1), 1e-6, dtype=jnp.float32)

    def reference_f32(x):                               # exact module math, f32
        h = jnp.tanh(x @ w1.T + b1.T)
        return jax.nn.log_softmax(h @ w2.T + b2.T, axis=1)

    def reference_bf16(x):                              # same bf16-operand policy as kernel
        h = jnp.dot(x.astype(jnp.bfloat16), w1.T.astype(jnp.bfloat16),
                    preferred_element_type=jnp.float32) + b1.T
        h = jnp.tanh(h)
        logits = jnp.dot(h.astype(jnp.bfloat16), w2.T.astype(jnp.bfloat16),
                         preferred_element_type=jnp.float32) + b2.T
        return jax.nn.log_softmax(logits, axis=1)

    # --- small batch (single tile) + 1-D obs path (to_tensor unsqueeze) ---
    x_small = jax.random.normal(kx, (batch, obs_dim), dtype=jnp.float32)
    lp_small = actor_forward(x_small, w1, b1, w2, b2)
    jax.block_until_ready(lp_small)
    assert lp_small.shape == (batch, n_actions)
    assert actor_forward(x_small[0], w1, b1, w2, b2).shape == (1, n_actions)

    # --- larger batch: exercises the batch grid (multiple tiles) + padding ---
    x_big = jax.random.normal(kb, (600, obs_dim), dtype=jnp.float32)
    lp_big = actor_forward(x_big, w1, b1, w2, b2)
    jax.block_until_ready(lp_big)
    assert lp_big.shape == (600, n_actions)

    for x_in, lp in ((x_small, lp_small), (x_big, lp_big)):
        # Tight check vs a reference using the identical bf16-operand policy.
        assert jnp.allclose(lp, reference_bf16(x_in), atol=2e-3, rtol=2e-3), \
            "mismatch vs bf16-operand reference"
        # Loose check vs the pure-f32 module math (bf16 MXU operands only differ
        # at the ~1e-2 level for this tiny policy head).
        assert jnp.allclose(lp, reference_f32(x_in), atol=1e-1, rtol=1e-1), \
            "mismatch vs f32 reference"
        # Valid log-probabilities: each row normalizes to 1.
        assert jnp.allclose(jnp.sum(jnp.exp(lp), axis=1), 1.0, atol=1e-3), \
            "log_softmax rows do not normalize"

    # TODO(synk): get_action (Categorical.sample + log_prob) is host/JAX-side
    # distribution logic; it could be fused in-kernel via pltpu.prng_seed +
    # pltpu.prng_random_bits (Gumbel-max) to return int32 actions directly.

    print("KERNEL_OK")
</pallas_src>

<mosaic_0001>
module attributes {stable_mosaic.version = 11 : i64} {
  func.func @actor_kernel(%arg0: i32, %arg1: memref<8x256xf32, #tpu.memory_space<vmem>>, %arg2: memref<64x8xbf16, #tpu.memory_space<vmem>>, %arg3: memref<64x1xf32, #tpu.memory_space<vmem>>, %arg4: memref<4x64xbf16, #tpu.memory_space<vmem>>, %arg5: memref<4x1xf32, #tpu.memory_space<vmem>>, %arg6: memref<4x256xf32, #tpu.memory_space<vmem>>) attributes {dimension_semantics = [#tpu.dimension_semantics<parallel>], iteration_bounds = array<i64: 1>, scalar_prefetch = 0 : i64, scratch_operands = 0 : i64, tpu.core_type = #tpu.core_type<tc>, window_params = [{transform_indices = @transform_0, window_bounds = array<i64: 8, 256>}, {pipeline_mode = #tpu.pipeline_mode<synchronous>, transform_indices = @transform_1, window_bounds = array<i64: 64, 8>}, {pipeline_mode = #tpu.pipeline_mode<synchronous>, transform_indices = @transform_2, window_bounds = array<i64: 64, 1>}, {pipeline_mode = #tpu.pipeline_mode<synchronous>, transform_indices = @transform_3, window_bounds = array<i64: 4, 64>}, {pipeline_mode = #tpu.pipeline_mode<synchronous>, transform_indices = @transform_4, window_bounds = array<i64: 4, 1>}, {transform_indices = @transform_5, window_bounds = array<i64: 4, 256>}]} {
    %c0 = arith.constant 0 : index
    %c0_0 = arith.constant 0 : index
    %0 = vector.load %arg1[%c0, %c0_0] : memref<8x256xf32, #tpu.memory_space<vmem>>, vector<8x256xf32>
    %1 = arith.truncf %0 : vector<8x256xf32> to vector<8x256xbf16>
    %c0_1 = arith.constant 0 : index
    %c0_2 = arith.constant 0 : index
    %2 = vector.load %arg2[%c0_1, %c0_2] : memref<64x8xbf16, #tpu.memory_space<vmem>>, vector<64x8xbf16>
    %cst = arith.constant dense<0.000000e+00> : vector<64x256xf32>
    %3 = tpu.matmul %2, %1, %cst {dimension_numbers = #tpu.dot_dimension_numbers<[1], [0], [0], [1], [0, 0, 1, 1], [], []>} : vector<64x8xbf16>, vector<8x256xbf16>, vector<64x256xf32> -> vector<64x256xf32>
    %c0_3 = arith.constant 0 : index
    %c0_4 = arith.constant 0 : index
    %4 = vector.load %arg3[%c0_3, %c0_4] : memref<64x1xf32, #tpu.memory_space<vmem>>, vector<64x1xf32>
    %5 = vector.broadcast %4 : vector<64x1xf32> to vector<64x256xf32>
    %6 = arith.addf %3, %5 : vector<64x256xf32>
    %7 = math.tanh %6 : vector<64x256xf32>
    %c0_5 = arith.constant 0 : index
    %c0_6 = arith.constant 0 : index
    %8 = vector.load %arg4[%c0_5, %c0_6] : memref<4x64xbf16, #tpu.memory_space<vmem>>, vector<4x64xbf16>
    %9 = arith.truncf %7 : vector<64x256xf32> to vector<64x256xbf16>
    %cst_7 = arith.constant dense<0.000000e+00> : vector<4x256xf32>
    %10 = tpu.matmul %8, %9, %cst_7 {dimension_numbers = #tpu.dot_dimension_numbers<[1], [0], [0], [1], [0, 0, 1, 1], [], []>} : vector<4x64xbf16>, vector<64x256xbf16>, vector<4x256xf32> -> vector<4x256xf32>
    %c0_8 = arith.constant 0 : index
    %c0_9 = arith.constant 0 : index
    %11 = vector.load %arg5[%c0_8, %c0_9] : memref<4x1xf32, #tpu.memory_space<vmem>>, vector<4x1xf32>
    %12 = vector.broadcast %11 : vector<4x1xf32> to vector<4x256xf32>
    %13 = arith.addf %10, %12 : vector<4x256xf32>
    %cst_10 = arith.constant dense<0xFF800000> : vector<256xf32>
    %14 = vector.multi_reduction <maximumf>, %13, %cst_10 [0] : vector<4x256xf32> to vector<256xf32>
    %15 = vector.shape_cast %14 : vector<256xf32> to vector<1x256xf32>
    %16 = vector.broadcast %15 : vector<1x256xf32> to vector<4x256xf32>
    %17 = arith.subf %13, %16 : vector<4x256xf32>
    %18 = math.exp %17 : vector<4x256xf32>
    %cst_11 = arith.constant dense<0.000000e+00> : vector<256xf32>
    %19 = vector.multi_reduction <add>, %18, %cst_11 [0] : vector<4x256xf32> to vector<256xf32>
    %20 = vector.shape_cast %19 : vector<256xf32> to vector<1x256xf32>
    %21 = math.log %20 : vector<1x256xf32>
    %22 = vector.broadcast %21 : vector<1x256xf32> to vector<4x256xf32>
    %23 = arith.subf %17, %22 : vector<4x256xf32>
    %c0_12 = arith.constant 0 : index
    %c0_13 = arith.constant 0 : index
    %24 = vector.load %arg6[%c0_12, %c0_13] : memref<4x256xf32, #tpu.memory_space<vmem>>, vector<4x256xf32>
    tpu.vector_store %arg6[%c0_12, %c0_13], %23 {strides = array<i32>} : memref<4x256xf32, #tpu.memory_space<vmem>>, vector<4x256xf32>,
    return
  }
  func.func @transform_0(%arg0: i32) -> (i32, i32) {
    %c0_i32 = arith.constant 0 : i32
    %c0_i32_0 = arith.constant 0 : i32
    return %c0_i32, %arg0 : i32, i32
  }
  func.func @transform_1(%arg0: i32) -> (i32, i32) {
    %c0_i32 = arith.constant 0 : i32
    %c0_i32_0 = arith.constant 0 : i32
    %c0_i32_1 = arith.constant 0 : i32
    return %c0_i32, %c0_i32_0 : i32, i32
  }
  func.func @transform_2(%arg0: i32) -> (i32, i32) {
    %c0_i32 = arith.constant 0 : i32
    %c0_i32_0 = arith.constant 0 : i32
    %c0_i32_1 = arith.constant 0 : i32
    return %c0_i32, %c0_i32_0 : i32, i32
  }
  func.func @transform_3(%arg0: i32) -> (i32, i32) {
    %c0_i32 = arith.constant 0 : i32
    %c0_i32_0 = arith.constant 0 : i32
    %c0_i32_1 = arith.constant 0 : i32
    return %c0_i32, %c0_i32_0 : i32, i32
  }
  func.func @transform_4(%arg0: i32) -> (i32, i32) {
    %c0_i32 = arith.constant 0 : i32
    %c0_i32_0 = arith.constant 0 : i32
    %c0_i32_1 = arith.constant 0 : i32
    return %c0_i32, %c0_i32_0 : i32, i32
  }
  func.func @transform_5(%arg0: i32) -> (i32, i32) {
    %c0_i32 = arith.constant 0 : i32
    %c0_i32_0 = arith.constant 0 : i32
    return %c0_i32, %arg0 : i32, i32
  }
}

</mosaic_0001>

<llo_original>
// kernel: actor_forward.1
$region0: #{actor_forward.1}
  #allocation0 [shape = 'u32[]', space=smem, size = 0x4, offset = 0x4, fixed_abs, tag = 'smem constant byte address 0x4 - core index']
  #allocation1 [shape = 'u32[144,128]{1,0:T(1,128)}', space=vmem, size = 0x12000, scoped, tag = 'internal scratch']
  %s0 = inlined_call_operand.vmem [shape: f32[8,256], index: 0, kind: input, shape index: {}]
  %s1 = inlined_call_operand.vmem [shape: bf16[64,8], index: 1, kind: input, shape index: {}]
  %s2 = inlined_call_operand.vmem [shape: f32[64,1], index: 2, kind: input, shape index: {}]
  %s3 = inlined_call_operand.vmem [shape: bf16[4,64], index: 3, kind: input, shape index: {}]
  %s4 = inlined_call_operand.vmem [shape: f32[4,1], index: 4, kind: input, shape index: {}]
  %s5 = inlined_call_operand.vmem [shape: f32[4,256], index: 5, kind: output, shape index: {}]
  %s6 = sld [smem:[#allocation0]]
  $region30: #{actor_forward.1} parent=0
    _
  %s8 = ssub.s32 1, %s6
  %s9 = scalar_select 0, %s8, %s6
  // Predicated region
  $region2: #{actor_forward.1} parent=0 // pred_check
    _
  $region3: #{actor_forward.1} parent=0 // pred_check_branch
    %11 = sbr.rel (0) target = $region5
  $region4: #{actor_forward.1} parent=0 // pred_region
    _
  $region5: #{actor_forward.1} parent=0 // pred_fallthru
    _
  // Predicated region
  $region6: #{actor_forward.1} parent=0 // pred_check
    _
  $region7: #{actor_forward.1} parent=0 // pred_check_branch
    %13 = sbr.rel (0) target = $region9
  $region8: #{actor_forward.1} parent=0 // pred_region
    _
  $region9: #{actor_forward.1} parent=0 // pred_fallthru
    _
  // Predicated region
  $region10: #{actor_forward.1} parent=0 // pred_check
    _
  $region11: #{actor_forward.1} parent=0 // pred_check_branch
    %15 = sbr.rel (0) target = $region13
  $region12: #{actor_forward.1} parent=0 // pred_region
    _
  $region13: #{actor_forward.1} parent=0 // pred_fallthru
    _
  // Predicated region
  $region14: #{actor_forward.1} parent=0 // pred_check
    _
  $region15: #{actor_forward.1} parent=0 // pred_check_branch
    %17 = sbr.rel (0) target = $region17
  $region16: #{actor_forward.1} parent=0 // pred_region
    _
  $region17: #{actor_forward.1} parent=0 // pred_fallthru
    _
  // Predicated region
  $region18: #{actor_forward.1} parent=0 // pred_check
    _
  $region19: #{actor_forward.1} parent=0 // pred_check_branch
    %19 = sbr.rel (0) target = $region21
  $region20: #{actor_forward.1} parent=0 // pred_region
    _
  $region21: #{actor_forward.1} parent=0 // pred_fallthru
    _
  %v21 = vld [vmem:[%s0] sm:$0xff]
  %v22 = vld [vmem:[%s0 + $0x8] sm:$0xff]
  %v23 = vpack.c.bf16 %v21, %v21
  %v24 = vpack.c.bf16 %v22, %v22
  %v25 = vld [vmem:[%s1] sm:$0xf]
  %v26 = vld [vmem:[%s1 + $0x4] sm:$0xf]
  %v27 = vld [vmem:[%s1 + $0x8] sm:$0xf]
  %v28 = vld [vmem:[%s1 + $0xc] sm:$0xf]
  %v29 = vld [vmem:[%s1 + $0x10] sm:$0xf]
  %v30 = vld [vmem:[%s1 + $0x14] sm:$0xf]
  %v31 = vld [vmem:[%s1 + $0x18] sm:$0xf]
  %v32 = vld [vmem:[%s1 + $0x1c] sm:$0xf]
  %v33 = vld [vmem:[%s2] sm:$0xff]
  %v34 = vld [vmem:[%s2 + $0x8] sm:$0xff]
  %v35 = vld [vmem:[%s2 + $0x10] sm:$0xff]
  %v36 = vld [vmem:[%s2 + $0x18] sm:$0xff]
  %v37 = vld [vmem:[%s2 + $0x20] sm:$0xff]
  %v38 = vld [vmem:[%s2 + $0x28] sm:$0xff]
  %v39 = vld [vmem:[%s2 + $0x30] sm:$0xff]
  %v40 = vld [vmem:[%s2 + $0x38] sm:$0xff]
  %42 = vset.pattern.permute.xlu0 0
  %43 = vperm.xlu0 %42, %v33
  %v44 = vpop.permute.xlu0 %43
  %47 = vset.pattern.permute.xlu0 0
  %48 = vperm.xlu0 %47, %v34
  %v49 = vpop.permute.xlu0 %48
  %52 = vset.pattern.permute.xlu0 0
  %53 = vperm.xlu0 %52, %v35
  %v54 = vpop.permute.xlu0 %53
  %57 = vset.pattern.permute.xlu0 0
  %58 = vperm.xlu0 %57, %v36
  %v59 = vpop.permute.xlu0 %58
  %62 = vset.pattern.permute.xlu0 0
  %63 = vperm.xlu0 %62, %v37
  %v64 = vpop.permute.xlu0 %63
  %67 = vset.pattern.permute.xlu0 0
  %68 = vperm.xlu0 %67, %v38
  %v69 = vpop.permute.xlu0 %68
  %72 = vset.pattern.permute.xlu0 0
  %73 = vperm.xlu0 %72, %v39
  %v74 = vpop.permute.xlu0 %73
  %77 = vset.pattern.permute.xlu0 0
  %78 = vperm.xlu0 %77, %v40
  %v79 = vpop.permute.xlu0 %78
  %v89 = vunpack.c.l.b16 %v25
  %v90 = vunpack.c.l.b16 %v26
  %v91 = vunpack.c.l.b16 %v27
  %v92 = vunpack.c.l.b16 %v28
  %v93 = vunpack.c.l.b16 %v29
  %v94 = vunpack.c.l.b16 %v30
  %v95 = vunpack.c.l.b16 %v31
  %v96 = vunpack.c.l.b16 %v32
  %v97 = vpack.c.b16 %v90, %v89
  %v98 = vpack.c.b16 %v92, %v91
  %v99 = vpack.c.b16 %v94, %v93
  %v100 = vpack.c.b16 %v96, %v95
  %vm101 = vcmask 64512
  %v103 = vsel %vm101, %v97, 0
  %v106 = vsel %vm101, %v98, 0
  %v109 = vsel %vm101, %v99, 0
  %v112 = vsel %vm101, %v100, 0
  %vm114 = vcmask 1043456
  %v116 = vsel %vm114, %v23, 0
  %v119 = vsel %vm114, %v24, 0
  %121 = vmatprep.subr.bf16.mxu0 %v119
  %122 = vmatpush1.bf16.msra.mxu0 %v116
  %123 = vmatprep.subr.bf16.mxu0 0
  %124 = vmatpush1.bf16.msra.mxu0 0
  %125 = vmatprep.subr.bf16.mxu0 0
  %126 = vmatpush1.bf16.msra.mxu0 0
  %127 = vmatprep.subr.bf16.mxu0 0
  %128 = vmatpush1.bf16.msra.mxu0 0
  %129 = vmatprep.subr.bf16.mxu0 0
  %130 = vmatpush1.bf16.msra.mxu0 0
  %131 = vmatprep.subr.bf16.mxu0 0
  %132 = vmatpush1.bf16.msra.mxu0 0
  %133 = vmatprep.subr.bf16.mxu0 0
  %134 = vmatpush1.bf16.msra.mxu0 0
  %135 = vmatprep.subr.bf16.mxu0 0
  %136 = vmatpush1.bf16.msra.mxu0 0
  %137 = vmatprep.subr.bf16.mxu0 0
  %138 = vmatpush1.bf16.msra.mxu0 0
  %139 = vmatprep.subr.bf16.mxu0 0
  %140 = vmatpush1.bf16.msra.mxu0 0
  %141 = vmatprep.subr.bf16.mxu0 0
  %142 = vmatpush1.bf16.msra.mxu0 0
  %143 = vmatprep.subr.bf16.mxu0 0
  %144 = vmatpush1.bf16.msra.mxu0 0
  %145 = vmatprep.subr.bf16.mxu0 0
  %146 = vmatpush1.bf16.msra.mxu0 0
  %147 = vmatprep.subr.bf16.mxu0 0
  %148 = vmatpush1.bf16.msra.mxu0 0
  %149 = vmatprep.subr.bf16.mxu0 0
  %150 = vmatpush1.bf16.msra.mxu0 0
  %151 = vmatprep.subr.bf16.mxu0 0
  %152 = vmatpush1.bf16.msra.mxu0 0
  %153 = vmatprep.mubr.bf16.mxu0 0
  %154 = vmatmul.mubr.bf16.gmra.mrb[0].mxu0 %v103
  %v155 = vpop.f32.mrb[0].mxu0
  %v156 = vadd.f32 %v44, %v155
  %v157 = vpop.f32.mrb[0].mxu0
  %v158 = vadd.f32 %v44, %v157
  %v159 = vpop.f32.mrb[0].mxu0
  %v160 = vadd.f32 %v49, %v159
  %v161 = vpop.f32.mrb[0].mxu0
  %v162 = vadd.f32 %v49, %v161
  %163 = vmatprep.mubr.bf16.mxu0 0
  %164 = vmatmul.mubr.bf16.gmra.mrb[0].mxu0 %v106
  %v165 = vpop.f32.mrb[0].mxu0
  %v166 = vadd.f32 %v54, %v165
  %v167 = vpop.f32.mrb[0].mxu0
  %v168 = vadd.f32 %v54, %v167
  %v169 = vpop.f32.mrb[0].mxu0
  %v170 = vadd.f32 %v59, %v169
  %v171 = vpop.f32.mrb[0].mxu0
  %v172 = vadd.f32 %v59, %v171
  %173 = vmatprep.mubr.bf16.mxu0 0
  %174 = vmatmul.mubr.bf16.gmra.mrb[0].mxu0 %v109
  %v175 = vpop.f32.mrb[0].mxu0
  %v176 = vadd.f32 %v64, %v175
  %v177 = vpop.f32.mrb[0].mxu0
  %v178 = vadd.f32 %v64, %v177
  %v179 = vpop.f32.mrb[0].mxu0
  %v180 = vadd.f32 %v69, %v179
  %v181 = vpop.f32.mrb[0].mxu0
  %v182 = vadd.f32 %v69, %v181
  %183 = vmatprep.mubr.bf16.mxu0 0
  %184 = vmatmul.mubr.bf16.gmra.mrb[0].mxu0 %v112
  %v185 = vpop.f32.mrb[0].mxu0
  %v186 = vadd.f32 %v74, %v185
  %v187 = vpop.f32.mrb[0].mxu0
  %v188 = vadd.f32 %v74, %v187
  %v189 = vpop.f32.mrb[0].mxu0
  %v190 = vadd.f32 %v79, %v189
  %v191 = vpop.f32.mrb[0].mxu0
  %v192 = vadd.f32 %v79, %v191
  %193 = vdwg.mxu0
  %v194 = vtanh.pop %v156
  %v195 = vtanh.pop %v158
  %v196 = vtanh.pop %v160
  %v197 = vtanh.pop %v162
  %v198 = vtanh.pop %v166
  %v199 = vtanh.pop %v168
  %v200 = vtanh.pop %v170
  %v201 = vtanh.pop %v172
  %v202 = vtanh.pop %v176
  %v203 = vtanh.pop %v178
  %v204 = vtanh.pop %v180
  %v205 = vtanh.pop %v182
  %v206 = vtanh.pop %v186
  %v207 = vtanh.pop %v188
  %v208 = vtanh.pop %v190
  %v209 = vtanh.pop %v192
  %v210 = vld [vmem:[%s3] sm:$0x3]
  %v211 = vpack.c.bf16 %v196, %v194
  %v212 = vpack.c.bf16 %v197, %v195
  %v213 = vpack.c.bf16 %v200, %v198
  %v214 = vpack.c.bf16 %v201, %v199
  %v215 = vpack.c.bf16 %v204, %v202
  %v216 = vpack.c.bf16 %v205, %v203
  %v217 = vpack.c.bf16 %v208, %v206
  %v218 = vpack.c.bf16 %v209, %v207
  %v219 = vld [vmem:[%s4] sm:$0xf]
  %221 = vset.pattern.permute.xlu0 0
  %222 = vperm.xlu0 %221, %v219
  %v223 = vpop.permute.xlu0 %222
  %vm225 = vcmask 523264
  %v227 = vsel %vm225, %v210, 0
  %229 = vmatprep.subr.bf16.mxu0 %v212
  %230 = vmatpush1.bf16.msra.mxu0 %v211
  %231 = vmatprep.subr.bf16.mxu0 %v214
  %232 = vmatpush1.bf16.msra.mxu0 %v213
  %233 = vmatprep.subr.bf16.mxu0 %v216
  %234 = vmatpush1.bf16.msra.mxu0 %v215
  %235 = vmatprep.subr.bf16.mxu0 %v218
  %236 = vmatpush1.bf16.msra.mxu0 %v217
  %237 = vmatprep.subr.bf16.mxu0 0
  %238 = vmatpush1.bf16.msra.mxu0 0
  %239 = vmatprep.subr.bf16.mxu0 0
  %240 = vmatpush1.bf16.msra.mxu0 0
  %241 = vmatprep.subr.bf16.mxu0 0
  %242 = vmatpush1.bf16.msra.mxu0 0
  %243 = vmatprep.subr.bf16.mxu0 0
  %244 = vmatpush1.bf16.msra.mxu0 0
  %245 = vmatprep.subr.bf16.mxu0 0
  %246 = vmatpush1.bf16.msra.mxu0 0
  %247 = vmatprep.subr.bf16.mxu0 0
  %248 = vmatpush1.bf16.msra.mxu0 0
  %249 = vmatprep.subr.bf16.mxu0 0
  %250 = vmatpush1.bf16.msra.mxu0 0
  %251 = vmatprep.subr.bf16.mxu0 0
  %252 = vmatpush1.bf16.msra.mxu0 0
  %253 = vmatprep.subr.bf16.mxu0 0
  %254 = vmatpush1.bf16.msra.mxu0 0
  %255 = vmatprep.subr.bf16.mxu0 0
  %256 = vmatpush1.bf16.msra.mxu0 0
  %257 = vmatprep.subr.bf16.mxu0 0
  %258 = vmatpush1.bf16.msra.mxu0 0
  %259 = vmatprep.subr.bf16.mxu0 0
  %260 = vmatpush1.bf16.msra.mxu0 0
  %261 = vmatprep.mubr.bf16.mxu0 0
  %262 = vmatmul.mubr.bf16.gmra.mrb[0].mxu0 %v227
  %v263 = vpop.f32.mrb[0].mxu0
  %v264 = vadd.f32 %v223, %v263
  %v265 = vpop.f32.mrb[0].mxu0
  %v266 = vadd.f32 %v223, %v265
  %v267 = vpop.f32.mrb[0].mxu0
  %v268 = vpop.f32.mrb[0].mxu0
  %269 = vdwg.mxu0
  %v270 = vsel %vm114, %v264, -inf
  %v271 = vrot.slane %v270, 4
  %v272 = vmax.f32 %v270, %v271
  %v273 = vrot.slane %v272, 2
  %v274 = vmax.f32 %v272, %v273
  %v275 = vrot.slane %v274, 1
  %v276 = vmax.f32 %v274, %v275
  %v277 = vsel %vm114, %v266, -inf
  %v278 = vrot.slane %v277, 4
  %v279 = vmax.f32 %v277, %v278
  %v280 = vrot.slane %v279, 2
  %v281 = vmax.f32 %v279, %v280
  %v282 = vrot.slane %v281, 1
  %v283 = vmax.f32 %v281, %v282
  %v284 = vsub.f32 %v264, %v276
  %v285 = vsub.f32 %v266, %v283
  %v286 = vmul.f32 %v284, 1.442695
  %v287 = vpow.pop %v286
  %v288 = vmul.f32 %v285, 1.442695
  %v289 = vpow.pop %v288
  %v290 = vsel %vm114, %v287, 0.0
  %v291 = vrot.slane %v290, 4
  %v292 = vadd.f32 %v290, %v291
  %v293 = vrot.slane %v292, 2
  %v294 = vadd.f32 %v292, %v293
  %v295 = vrot.slane %v294, 1
  %v296 = vadd.f32 %v294, %v295
  %v297 = vsel %vm114, %v289, 0.0
  %v298 = vrot.slane %v297, 4
  %v299 = vadd.f32 %v297, %v298
  %v300 = vrot.slane %v299, 2
  %v301 = vadd.f32 %v299, %v300
  %v302 = vrot.slane %v301, 1
  %v303 = vadd.f32 %v301, %v302
  %v304 = vlog2.pop %v296
  %v305 = vmul.f32 %v304, 0.6931472
  %v306 = vlog2.pop %v303
  %v307 = vmul.f32 %v306, 0.6931472
  %v308 = vsub.f32 %v284, %v305
  %v309 = vsub.f32 %v285, %v307
  %v312 = vcombine.low %v308, %v309
  %314 = vst [vmem:[%s5] sm:$0xff] %v312
  // Predicated region
  $region22: #{actor_forward.1} parent=0 // pred_check
    _
  $region23: #{actor_forward.1} parent=0 // pred_check_branch
    %316 = sbr.rel (0) target = $region25
  $region24: #{actor_forward.1} parent=0 // pred_region
    _
  $region25: #{actor_forward.1} parent=0 // pred_fallthru
    _
  // Predicated region
  $region26: #{actor_forward.1} parent=0 // pred_check
    _
  $region27: #{actor_forward.1} parent=0 // pred_check_branch
    %318 = sbr.rel (0) target = $region29
  $region28: #{actor_forward.1} parent=0 // pred_region
    _
  $region29: #{actor_forward.1} parent=0 // pred_fallthru
    _

</llo_original>
